<compile_context>
chip_gen: v7x
topology: tpu7x:2x2x1
jax: 0.10.0
libtpu: 0.0.40
codegen_flags: <defaults>
</compile_context>

<pallas_src>
import math
import functools

import jax
import jax.numpy as jnp
from jax.experimental import pallas as pl
from jax.experimental.pallas import tpu as pltpu

_NEG = -1e30  # finite "minus infinity": keeps the online-logsumexp rescale NaN-free


def _vmem_capacity_bytes():
    """Per-core VMEM capacity; falls back to the smallest current part (v7x, 64 MiB)."""
    try:
        info = pltpu.get_tpu_info()
        cap = int(getattr(info, "vmem_capacity_bytes", 0) or 0)
        if cap > 0:
            return cap
    except Exception:
        pass
    return 64 * 2 ** 20


def _num_tensorcores():
    """TensorCores a 'parallel' grid axis can be sharded over (megacore / v7x)."""
    try:
        kind = jax.devices()[0].device_kind.lower()
    except Exception:
        return 1
    if "v7" in kind or "7x" in kind:
        return 2
    if "v4" in kind:
        return 2
    if "v5" in kind and "lite" not in kind and "v5e" not in kind:
        return 2  # v5p megacore
    return 1


def _angular_penalty_kernel(x_ref, wt_ref, labels_ref, out_ref,
                            xn_sc, m_sc, se_sc, th_sc, *,
                            loss_type, s, m, eps, num_classes, block_c):
    c = pl.program_id(1)

    @pl.when(c == 0)
    def _init():
        # F.normalize(x, p=2, dim=1), once per batch tile; the softmax scale s is
        # folded in here so the matmul below directly yields s*wf.
        x = x_ref[...].astype(jnp.float32)
        inv = jax.lax.rsqrt(jnp.sum(x * x, axis=1, keepdims=True) + 1e-24)
        xn_sc[...] = (x * (inv * s)).astype(xn_sc.dtype)
        m_sc[...] = jnp.full_like(m_sc, _NEG)
        se_sc[...] = jnp.zeros_like(se_sc)
        th_sc[...] = jnp.zeros_like(th_sc)

    # (tN, D) @ (D, tC) -> s*wf in f32 on the MXU, no in-kernel transpose.
    z = jnp.dot(xn_sc[...], wt_ref[...], preferred_element_type=jnp.float32)

    tn, tc = z.shape
    col = jax.lax.broadcasted_iota(jnp.int32, (tn, tc), 1)   # block-invariant iota
    lab_local = labels_ref[...] - c * block_c                 # (tN, 1) int32
    is_label = col == lab_local
    # s*theta_i accumulation (each row's label falls in exactly one class block).
    # NOTE: out-of-range labels silently yield theta_i = 0 (torch would assert).
    th_sc[...] += jnp.sum(jnp.where(is_label, z, 0.0), axis=1, keepdims=True)

    # Exclude the label column (and padded columns of a partial last class block)
    # from the online logsumexp: this IS torch's sum over theta_not_i, so finalize
    # needs no subtraction (and no cancellation when the label logit dominates).
    if num_classes % block_c != 0:
        keep = jnp.logical_and(jnp.logical_not(is_label),
                               col < (num_classes - c * block_c))
    else:
        keep = jnp.logical_not(is_label)
    z = jnp.where(keep, z, _NEG)

    # Online logsumexp over the non-label classes of s*wf.
    m_prev = m_sc[...]
    m_new = jnp.maximum(m_prev, jnp.max(z, axis=1, keepdims=True))
    se_sc[...] = (se_sc[...] * jnp.exp(m_prev - m_new)
                  + jnp.sum(jnp.exp(z - m_new), axis=1, keepdims=True))
    m_sc[...] = m_new

    @pl.when(c == pl.num_programs(1) - 1)
    def _finalize():
        st = th_sc[...]                       # s * theta_i
        if loss_type == 'cosface':
            numerator = st - s * m            # s * (theta - m)
        elif loss_type == 'arcface':
            t = st * (1.0 / s)
            tcl = jnp.clip(t, -1.0 + eps, 1.0 - eps)
            # cos(acos(t) + m) == t*cos(m) - sqrt(1 - t^2)*sin(m)  (acos(t) in [0, pi])
            numerator = s * (tcl * math.cos(m) - jnp.sqrt(1.0 - tcl * tcl) * math.sin(m))
        else:
            # TODO(synk): sphereface needs cos(m*acos(t)) with non-integer m.
            raise NotImplementedError(loss_type)

        # denominator = exp(numerator) + sum_{j != label} exp(s*wf_j)
        m_run = m_sc[...]
        big = jnp.maximum(m_run, numerator)
        denom_scaled = jnp.exp(numerator - big) + se_sc[...] * jnp.exp(m_run - big)
        out_ref[...] = numerator - (big + jnp.log(denom_scaled))


def angular_penalty_sm_loss(x, labels, weight, loss_type='arcface',
                            eps=1e-7, s=None, m=None,
                            block_n=1024, block_c=4096, matmul_dtype=None):
    """x: (N, in_features); labels: (N,) int in [0, out_features);
    weight: (out_features, in_features) == torch nn.Linear.weight.
    matmul_dtype: optional cast (e.g. jnp.bfloat16) for the streamed matmul."""
    loss_type = loss_type.lower()
    assert loss_type in ('arcface', 'sphereface', 'cosface')
    if loss_type == 'sphereface':
        # TODO(synk): sphereface needs arccos with non-integer margin; not implemented.
        raise NotImplementedError("sphereface is not implemented in the Pallas kernel")
    defaults = {'arcface': (64.0, 0.5), 'sphereface': (64.0, 1.35), 'cosface': (30.0, 0.4)}
    ds_, dm_ = defaults[loss_type]
    s = ds_ if not s else s      # matches the torch module's `64.0 if not s else s`
    m = dm_ if not m else m

    N, D = x.shape
    C, D_w = weight.shape
    assert D == D_w
    assert len(labels) == N

    labels2d = labels.astype(jnp.int32).reshape(N, 1)

    mm_dtype = jnp.dtype(matmul_dtype) if matmul_dtype is not None else jnp.dtype(weight.dtype)
    # Pre-transpose W -> (D, C): streamed RHS blocks are (K, N)-shaped for the MXU.
    wt = weight.T.astype(mm_dtype)

    x_item = jnp.dtype(x.dtype).itemsize
    w_item = mm_dtype.itemsize

    vmem_cap = _vmem_capacity_bytes()
    vmem_budget = int(min(0.55 * vmem_cap, 80 * 2 ** 20))

    # --- batch tile ---------------------------------------------------------
    # W^T is re-streamed from HBM once per batch tile, so make tN as large as VMEM
    # allows (multiples of 128).  On dual-TensorCore parts keep >= 2 batch tiles so
    # the "parallel" axis can be sharded across both cores.
    if N <= block_n:
        tN = N
        if _num_tensorcores() >= 2 and N >= 256:
            tN = min(N, (((N + 1) // 2 + 127) // 128) * 128)
    else:
        tN = max(128, (block_n // 128) * 128)

    # --- class tile ---------------------------------------------------------
    # Streamed-W block budget scales with the part's VMEM (v7x 64 MiB -> ~8 MiB,
    # v5e/v6e 128 MiB -> ~16 MiB), capped by block_c and C; multiples of 128 lanes.
    w_block_budget = int(min(24 * 2 ** 20, max(4 * 2 ** 20, vmem_cap // 8)))
    if C <= 128:
        tC = C
    else:
        bc = max(128, (block_c // 128) * 128)
        by_budget = max(128, (w_block_budget // max(1, D * w_item)) // 128 * 128)
        tC = max(128, min((C // 128) * 128, bc, by_budget))

    # --- VMEM estimate (double-buffered inputs + scratch + live temporaries) -
    def _est(tn_, tc_):
        return (2 * D * tc_ * w_item            # streamed W^T blocks (double-buffered)
                + 2 * tn_ * D * x_item          # x block (double-buffered)
                + tn_ * D * (w_item + 4)        # s*x/||x|| scratch + f32 normalize temp
                + 4 * tn_ * tc_ * 4             # live (tN,tC) f32/i32 temporaries
                + 8 * tn_ * 128 * 4)            # labels / out / per-row stats (lane-padded)

    while tC > 128 and _est(tN, tC) > vmem_budget:
        tC = max(128, (((tC // 2) + 127) // 128) * 128)
    while tN > 128 and _est(tN, tC) > vmem_budget:
        tN = max(128, (((tN // 2) + 127) // 128) * 128)

    grid = (pl.cdiv(N, tN), pl.cdiv(C, tC))
    vmem_limit = int(min(int(0.72 * vmem_cap), max(2 * _est(tN, tC), 32 * 2 ** 20)))

    kernel = functools.partial(
        _angular_penalty_kernel, loss_type=loss_type, s=float(s), m=float(m),
        eps=float(eps), num_classes=C, block_c=tC)

    per_row_L = pl.pallas_call(
        kernel,
        out_shape=jax.ShapeDtypeStruct((N, 1), jnp.float32),
        grid_spec=pltpu.PrefetchScalarGridSpec(
            num_scalar_prefetch=0,
            grid=grid,
            in_specs=[
                pl.BlockSpec((tN, D), lambda n, c: (n, 0)),   # x (resident over c)
                pl.BlockSpec((D, tC), lambda n, c: (0, c)),   # W^T streamed over c
                pl.BlockSpec((tN, 1), lambda n, c: (n, 0)),   # labels
            ],
            out_specs=pl.BlockSpec((tN, 1), lambda n, c: (n, 0)),
            scratch_shapes=[
                pltpu.VMEM((tN, D), mm_dtype),       # s * normalized x, matmul dtype
                pltpu.VMEM((tN, 1), jnp.float32),    # running max of s*wf (non-label)
                pltpu.VMEM((tN, 1), jnp.float32),    # running sum of exp (non-label)
                pltpu.VMEM((tN, 1), jnp.float32),    # s * theta_i
            ]),
        compiler_params=pltpu.CompilerParams(
            dimension_semantics=("parallel", "arbitrary"),
            vmem_limit_bytes=vmem_limit),
    )(x, wt, labels2d)

    return -jnp.mean(per_row_L)


if __name__ == "__main__":
    key = jax.random.PRNGKey(0)
    N, in_features, out_features = 8, 128, 256
    kx, kw, kl = jax.random.split(key, 3)

    x = jax.random.normal(kx, (N, in_features), dtype=jnp.float32)
    labels = jax.random.randint(kl, (N,), 0, out_features, dtype=jnp.int32)

    # Deterministic nn.Linear(in_features, out_features, bias=False) weight:
    # uniform(-1/sqrt(in_features), 1/sqrt(in_features)), shape (out, in).
    bound = 1.0 / math.sqrt(in_features)
    W = jax.random.uniform(kw, (out_features, in_features),
                           minval=-bound, maxval=bound, dtype=jnp.float32)

    # Pure-JAX reference (mirrors the torch forward exactly).
    def ref_loss(x, labels, W, loss_type, s_, m_, eps_=1e-7):
        xn = x / jnp.maximum(jnp.linalg.norm(x, axis=1, keepdims=True), 1e-12)
        wf = xn @ W.T
        th = wf[jnp.arange(x.shape[0]), labels]
        if loss_type == 'arcface':
            num = s_ * jnp.cos(jnp.arccos(jnp.clip(th, -1.0 + eps_, 1.0 - eps_)) + m_)
        else:  # cosface
            num = s_ * (th - m_)
        mask = jnp.arange(W.shape[0])[None, :] == labels[:, None]
        den = jnp.exp(num) + jnp.sum(jnp.where(mask, 0.0, jnp.exp(s_ * wf)), axis=1)
        return -jnp.mean(num - jnp.log(den))

    # arcface (default): block_c=128 over C=256 exercises the streamed/online path.
    loss = jax.block_until_ready(
        angular_penalty_sm_loss(x, labels, W, loss_type='arcface', block_c=128))
    ref = ref_loss(x, labels, W, 'arcface', 64.0, 0.5)
    assert jnp.allclose(loss, ref, rtol=1e-4, atol=5e-4), (loss, ref)

    # cosface
    loss_c = jax.block_until_ready(
        angular_penalty_sm_loss(x, labels, W, loss_type='cosface', block_c=128))
    ref_c = ref_loss(x, labels, W, 'cosface', 30.0, 0.4)
    assert jnp.allclose(loss_c, ref_c, rtol=1e-4, atol=5e-4), (loss_c, ref_c)

    # partial last class block (C=200 is not a multiple of the 128-wide class tile).
    C2 = 200
    W2 = jax.random.uniform(kw, (C2, in_features),
                            minval=-bound, maxval=bound, dtype=jnp.float32)
    labels2 = jax.random.randint(kl, (N,), 0, C2, dtype=jnp.int32)
    loss_p = jax.block_until_ready(
        angular_penalty_sm_loss(x, labels2, W2, loss_type='arcface', block_c=128))
    ref_p = ref_loss(x, labels2, W2, 'arcface', 64.0, 0.5)
    assert jnp.allclose(loss_p, ref_p, rtol=1e-4, atol=5e-4), (loss_p, ref_p)

    # opt-in bf16 matmul path on f32 inputs (loose accuracy check).
    loss_b = jax.block_until_ready(
        angular_penalty_sm_loss(x, labels, W, loss_type='arcface', block_c=128,
                                matmul_dtype=jnp.bfloat16))
    assert jnp.allclose(loss_b, ref, rtol=5e-2, atol=5e-2), (loss_b, ref)

    # native bf16 inputs/weights exercise the bf16 MXU path (loose check: finite).
    loss_bf16 = jax.block_until_ready(
        angular_penalty_sm_loss(x.astype(jnp.bfloat16), labels,
                                W.astype(jnp.bfloat16), loss_type='arcface',
                                block_c=128))
    assert bool(jnp.isfinite(loss_bf16)), loss_bf16

    print("KERNEL_OK")
</pallas_src>

<mosaic_0001>
module attributes {stable_mosaic.version = 11 : i64} {
  func.func @_angular_penalty_kernel(%arg0: i32, %arg1: i32, %arg2: memref<8x128xf32, #tpu.memory_space<vmem>>, %arg3: memref<128x128xf32, #tpu.memory_space<vmem>>, %arg4: memref<8x1xi32, #tpu.memory_space<vmem>>, %arg5: memref<8x1xf32, #tpu.memory_space<vmem>>, %arg6: memref<8x128xf32, #tpu.memory_space<vmem>>, %arg7: memref<8x1xf32, #tpu.memory_space<vmem>>, %arg8: memref<8x1xf32, #tpu.memory_space<vmem>>, %arg9: memref<8x1xf32, #tpu.memory_space<vmem>>) attributes {dimension_semantics = [#tpu.dimension_semantics<parallel>, #tpu.dimension_semantics<arbitrary>], iteration_bounds = array<i64: 1, 2>, scalar_prefetch = 0 : i64, scratch_operands = 4 : i64, tpu.core_type = #tpu.core_type<tc>, window_params = [{transform_indices = @transform_0, window_bounds = array<i64: 8, 128>}, {transform_indices = @transform_1, window_bounds = array<i64: 128, 128>}, {transform_indices = @transform_2, window_bounds = array<i64: 8, 1>}, {transform_indices = @transform_3, window_bounds = array<i64: 8, 1>}]} {
    %c0_i32 = arith.constant 0 : i32
    %0 = arith.cmpi eq, %arg1, %c0_i32 : i32
    %1 = arith.extui %0 : i1 to i32
    %c0_i32_0 = arith.constant 0 : i32
    %2 = arith.cmpi ne, %1, %c0_i32_0 : i32
    scf.if %2 {
      %c0_25 = arith.constant 0 : index
      %c0_26 = arith.constant 0 : index
      %42 = vector.load %arg2[%c0_25, %c0_26] : memref<8x128xf32, #tpu.memory_space<vmem>>, vector<8x128xf32>
      %43 = arith.mulf %42, %42 : vector<8x128xf32>
      %cst_27 = arith.constant dense<0.000000e+00> : vector<8xf32>
      %44 = vector.multi_reduction <add>, %43, %cst_27 [1] : vector<8x128xf32> to vector<8xf32>
      %45 = vector.shape_cast %44 : vector<8xf32> to vector<8x1xf32>
      %cst_28 = arith.constant 1.000000e-24 : f32
      %46 = vector.broadcast %cst_28 : f32 to vector<8x1xf32>
      %47 = arith.addf %45, %46 : vector<8x1xf32>
      %48 = math.rsqrt %47 : vector<8x1xf32>
      %cst_29 = arith.constant 6.400000e+01 : f32
      %49 = vector.broadcast %cst_29 : f32 to vector<8x1xf32>
      %50 = arith.mulf %48, %49 : vector<8x1xf32>
      %51 = vector.broadcast %50 : vector<8x1xf32> to vector<8x128xf32>
      %52 = arith.mulf %42, %51 : vector<8x128xf32>
      %c0_30 = arith.constant 0 : index
      %c0_31 = arith.constant 0 : index
      %53 = vector.load %arg6[%c0_30, %c0_31] : memref<8x128xf32, #tpu.memory_space<vmem>>, vector<8x128xf32>
      tpu.vector_store %arg6[%c0_30, %c0_31], %52 {strides = array<i32>} : memref<8x128xf32, #tpu.memory_space<vmem>>, vector<8x128xf32>,
      %cst_32 = arith.constant -1.000000e+30 : f32
      %54 = vector.broadcast %cst_32 : f32 to vector<8x1xf32>
      %c0_33 = arith.constant 0 : index
      %c0_34 = arith.constant 0 : index
      %55 = vector.load %arg7[%c0_33, %c0_34] : memref<8x1xf32, #tpu.memory_space<vmem>>, vector<8x1xf32>
      tpu.vector_store %arg7[%c0_33, %c0_34], %54 {strides = array<i32>} : memref<8x1xf32, #tpu.memory_space<vmem>>, vector<8x1xf32>,
      %cst_35 = arith.constant 0.000000e+00 : f32
      %56 = vector.broadcast %cst_35 : f32 to vector<8x1xf32>
      %c0_36 = arith.constant 0 : index
      %c0_37 = arith.constant 0 : index
      %57 = vector.load %arg8[%c0_36, %c0_37] : memref<8x1xf32, #tpu.memory_space<vmem>>, vector<8x1xf32>
      tpu.vector_store %arg8[%c0_36, %c0_37], %56 {strides = array<i32>} : memref<8x1xf32, #tpu.memory_space<vmem>>, vector<8x1xf32>,
      %cst_38 = arith.constant 0.000000e+00 : f32
      %58 = vector.broadcast %cst_38 : f32 to vector<8x1xf32>
      %c0_39 = arith.constant 0 : index
      %c0_40 = arith.constant 0 : index
      %59 = vector.load %arg9[%c0_39, %c0_40] : memref<8x1xf32, #tpu.memory_space<vmem>>, vector<8x1xf32>
      tpu.vector_store %arg9[%c0_39, %c0_40], %58 {strides = array<i32>} : memref<8x1xf32, #tpu.memory_space<vmem>>, vector<8x1xf32>,
    } else {
    }
    %c0 = arith.constant 0 : index
    %c0_1 = arith.constant 0 : index
    %3 = vector.load %arg6[%c0, %c0_1] : memref<8x128xf32, #tpu.memory_space<vmem>>, vector<8x128xf32>
    %c0_2 = arith.constant 0 : index
    %c0_3 = arith.constant 0 : index
    %4 = vector.load %arg3[%c0_2, %c0_3] : memref<128x128xf32, #tpu.memory_space<vmem>>, vector<128x128xf32>
    %cst = arith.constant dense<0.000000e+00> : vector<8x128xf32>
    %5 = tpu.matmul %3, %4, %cst {dimension_numbers = #tpu.dot_dimension_numbers<[1], [0], [0], [1], [0, 0, 1, 1], [], []>} : vector<8x128xf32>, vector<128x128xf32>, vector<8x128xf32> -> vector<8x128xf32>
    %6 = tpu.iota {dimensions = array<i32: 1>} : vector<8x128xi32>
    %c0_4 = arith.constant 0 : index
    %c0_5 = arith.constant 0 : index
    %7 = vector.load %arg4[%c0_4, %c0_5] : memref<8x1xi32, #tpu.memory_space<vmem>>, vector<8x1xi32>
    %c128_i32 = arith.constant 128 : i32
    %8 = arith.muli %arg1, %c128_i32 : i32
    %9 = vector.broadcast %8 : i32 to vector<8x1xi32>
    %10 = arith.subi %7, %9 : vector<8x1xi32>
    %11 = vector.broadcast %10 : vector<8x1xi32> to vector<8x128xi32>
    %12 = arith.cmpi eq, %6, %11 : vector<8x128xi32>
    %c0_6 = arith.constant 0 : index
    %c0_7 = arith.constant 0 : index
    %13 = vector.load %arg9[%c0_6, %c0_7] : memref<8x1xf32, #tpu.memory_space<vmem>>, vector<8x1xf32>
    %cst_8 = arith.constant 0.000000e+00 : f32
    %14 = vector.broadcast %cst_8 : f32 to vector<8x128xf32>
    %15 = arith.select %12, %5, %14 : vector<8x128xi1>, vector<8x128xf32>
    %cst_9 = arith.constant dense<0.000000e+00> : vector<8xf32>
    %16 = vector.multi_reduction <add>, %15, %cst_9 [1] : vector<8x128xf32> to vector<8xf32>
    %17 = vector.shape_cast %16 : vector<8xf32> to vector<8x1xf32>
    %18 = arith.addf %13, %17 : vector<8x1xf32>
    %c0_10 = arith.constant 0 : index
    %c0_11 = arith.constant 0 : index
    %19 = vector.load %arg9[%c0_10, %c0_11] : memref<8x1xf32, #tpu.memory_space<vmem>>, vector<8x1xf32>
    tpu.vector_store %arg9[%c0_10, %c0_11], %18 {strides = array<i32>} : memref<8x1xf32, #tpu.memory_space<vmem>>, vector<8x1xf32>,
    %cst_12 = arith.constant dense<true> : vector<8x128xi1>
    %20 = arith.xori %12, %cst_12 : vector<8x128xi1>
    %cst_13 = arith.constant -1.000000e+30 : f32
    %21 = vector.broadcast %cst_13 : f32 to vector<8x128xf32>
    %22 = arith.select %20, %5, %21 : vector<8x128xi1>, vector<8x128xf32>
    %c0_14 = arith.constant 0 : index
    %c0_15 = arith.constant 0 : index
    %23 = vector.load %arg7[%c0_14, %c0_15] : memref<8x1xf32, #tpu.memory_space<vmem>>, vector<8x1xf32>
    %cst_16 = arith.constant dense<0xFF800000> : vector<8xf32>
    %24 = vector.multi_reduction <maximumf>, %22, %cst_16 [1] : vector<8x128xf32> to vector<8xf32>
    %25 = vector.shape_cast %24 : vector<8xf32> to vector<8x1xf32>
    %26 = arith.maximumf %23, %25 : vector<8x1xf32>
    %c0_17 = arith.constant 0 : index
    %c0_18 = arith.constant 0 : index
    %27 = vector.load %arg8[%c0_17, %c0_18] : memref<8x1xf32, #tpu.memory_space<vmem>>, vector<8x1xf32>
    %28 = arith.subf %23, %26 : vector<8x1xf32>
    %29 = math.exp %28 : vector<8x1xf32>
    %30 = arith.mulf %27, %29 : vector<8x1xf32>
    %31 = vector.broadcast %26 : vector<8x1xf32> to vector<8x128xf32>
    %32 = arith.subf %22, %31 : vector<8x128xf32>
    %33 = math.exp %32 : vector<8x128xf32>
    %cst_19 = arith.constant dense<0.000000e+00> : vector<8xf32>
    %34 = vector.multi_reduction <add>, %33, %cst_19 [1] : vector<8x128xf32> to vector<8xf32>
    %35 = vector.shape_cast %34 : vector<8xf32> to vector<8x1xf32>
    %36 = arith.addf %30, %35 : vector<8x1xf32>
    %c0_20 = arith.constant 0 : index
    %c0_21 = arith.constant 0 : index
    %37 = vector.load %arg8[%c0_20, %c0_21] : memref<8x1xf32, #tpu.memory_space<vmem>>, vector<8x1xf32>
    tpu.vector_store %arg8[%c0_20, %c0_21], %36 {strides = array<i32>} : memref<8x1xf32, #tpu.memory_space<vmem>>, vector<8x1xf32>,
    %c0_22 = arith.constant 0 : index
    %c0_23 = arith.constant 0 : index
    %38 = vector.load %arg7[%c0_22, %c0_23] : memref<8x1xf32, #tpu.memory_space<vmem>>, vector<8x1xf32>
    tpu.vector_store %arg7[%c0_22, %c0_23], %26 {strides = array<i32>} : memref<8x1xf32, #tpu.memory_space<vmem>>, vector<8x1xf32>,
    %c1_i32 = arith.constant 1 : i32
    %39 = arith.cmpi eq, %arg1, %c1_i32 : i32
    %40 = arith.extui %39 : i1 to i32
    %c0_i32_24 = arith.constant 0 : i32
    %41 = arith.cmpi ne, %40, %c0_i32_24 : i32
    scf.if %41 {
      %c0_25 = arith.constant 0 : index
      %c0_26 = arith.constant 0 : index
      %42 = vector.load %arg9[%c0_25, %c0_26] : memref<8x1xf32, #tpu.memory_space<vmem>>, vector<8x1xf32>
      %cst_27 = arith.constant 1.562500e-02 : f32
      %43 = vector.broadcast %cst_27 : f32 to vector<8x1xf32>
      %44 = arith.mulf %42, %43 : vector<8x1xf32>
      %cst_28 = arith.constant -0.99999988 : f32
      %cst_29 = arith.constant 0.99999988 : f32
      %45 = vector.broadcast %cst_28 : f32 to vector<8x1xf32>
      %46 = arith.maximumf %45, %44 : vector<8x1xf32>
      %47 = vector.broadcast %cst_29 : f32 to vector<8x1xf32>
      %48 = arith.minimumf %47, %46 : vector<8x1xf32>
      %cst_30 = arith.constant 0.87758255 : f32
      %49 = vector.broadcast %cst_30 : f32 to vector<8x1xf32>
      %50 = arith.mulf %48, %49 : vector<8x1xf32>
      %51 = arith.mulf %48, %48 : vector<8x1xf32>
      %cst_31 = arith.constant 1.000000e+00 : f32
      %52 = vector.broadcast %cst_31 : f32 to vector<8x1xf32>
      %53 = arith.subf %52, %51 : vector<8x1xf32>
      %54 = math.sqrt %53 : vector<8x1xf32>
      %cst_32 = arith.constant 0.47942555 : f32
      %55 = vector.broadcast %cst_32 : f32 to vector<8x1xf32>
      %56 = arith.mulf %54, %55 : vector<8x1xf32>
      %57 = arith.subf %50, %56 : vector<8x1xf32>
      %cst_33 = arith.constant 6.400000e+01 : f32
      %58 = vector.broadcast %cst_33 : f32 to vector<8x1xf32>
      %59 = arith.mulf %58, %57 : vector<8x1xf32>
      %c0_34 = arith.constant 0 : index
      %c0_35 = arith.constant 0 : index
      %60 = vector.load %arg7[%c0_34, %c0_35] : memref<8x1xf32, #tpu.memory_space<vmem>>, vector<8x1xf32>
      %61 = arith.maximumf %60, %59 : vector<8x1xf32>
      %62 = arith.subf %59, %61 : vector<8x1xf32>
      %63 = math.exp %62 : vector<8x1xf32>
      %c0_36 = arith.constant 0 : index
      %c0_37 = arith.constant 0 : index
      %64 = vector.load %arg8[%c0_36, %c0_37] : memref<8x1xf32, #tpu.memory_space<vmem>>, vector<8x1xf32>
      %65 = arith.subf %60, %61 : vector<8x1xf32>
      %66 = math.exp %65 : vector<8x1xf32>
      %67 = arith.mulf %64, %66 : vector<8x1xf32>
      %68 = arith.addf %63, %67 : vector<8x1xf32>
      %69 = math.log %68 : vector<8x1xf32>
      %70 = arith.addf %61, %69 : vector<8x1xf32>
      %71 = arith.subf %59, %70 : vector<8x1xf32>
      %c0_38 = arith.constant 0 : index
      %c0_39 = arith.constant 0 : index
      %72 = vector.load %arg5[%c0_38, %c0_39] : memref<8x1xf32, #tpu.memory_space<vmem>>, vector<8x1xf32>
      tpu.vector_store %arg5[%c0_38, %c0_39], %71 {strides = array<i32>} : memref<8x1xf32, #tpu.memory_space<vmem>>, vector<8x1xf32>,
    } else {
    }
    return
  }
  func.func @transform_0(%arg0: i32, %arg1: i32) -> (i32, i32) {
    %c0_i32 = arith.constant 0 : i32
    %c0_i32_0 = arith.constant 0 : i32
    return %arg0, %c0_i32 : i32, i32
  }
  func.func @transform_1(%arg0: i32, %arg1: i32) -> (i32, i32) {
    %c0_i32 = arith.constant 0 : i32
    %c0_i32_0 = arith.constant 0 : i32
    return %c0_i32, %arg1 : i32, i32
  }
  func.func @transform_2(%arg0: i32, %arg1: i32) -> (i32, i32) {
    %c0_i32 = arith.constant 0 : i32
    %c0_i32_0 = arith.constant 0 : i32
    return %arg0, %c0_i32 : i32, i32
  }
  func.func @transform_3(%arg0: i32, %arg1: i32) -> (i32, i32) {
    %c0_i32 = arith.constant 0 : i32
    %c0_i32_0 = arith.constant 0 : i32
    return %arg0, %c0_i32 : i32, i32
  }
}

</mosaic_0001>

<llo_original>
// kernel: tpu_custom_call.1
$region0: #{tpu_custom_call.1}
  #allocation0 [shape = 'u32[]', space=smem, size = 0x4, offset = 0x4, fixed_abs, tag = 'smem constant byte address 0x4 - core index']
  #allocation1 [shape = 'u32[144,128]{1,0:T(1,128)}', space=vmem, size = 0x12000, scoped, tag = 'internal scratch']
  #allocation2 [shape = 'f32[8,128]{1,0:T(8,128)}', space=vmem, size = 0x1000, scoped, tag = 'scratch operand']
  #allocation3 [shape = 'f32[8,1]{1,0:T(8,128)}', space=vmem, size = 0x1000, scoped, tag = 'scratch operand']
  #allocation4 [shape = 'f32[8,1]{1,0:T(8,128)}', space=vmem, size = 0x1000, scoped, tag = 'scratch operand']
  #allocation5 [shape = 'f32[8,1]{1,0:T(8,128)}', space=vmem, size = 0x1000, scoped, tag = 'scratch operand']
  %s0 = inlined_call_operand.vmem [shape: f32[8,128], index: 0, kind: input, shape index: {}]
  %s1 = inlined_call_operand.hbm [shape: f32[128,256], index: 1, kind: input, shape index: {}]
  %s2 = inlined_call_operand.vmem [shape: s32[8,1], index: 2, kind: input, shape index: {}]
  %s3 = inlined_call_operand.vmem [shape: f32[8,1], index: 3, kind: output, shape index: {}]
  %s4 = sld [smem:[#allocation0]]
  $region57: #{tpu_custom_call.1} parent=0
    _
  %s6 = ssub.s32 1, %s4
  %s7 = scalar_select 0, %s6, %s4
  $region1: #{tpu_custom_call.1} parent=0
    #allocation6 [shape = 'u8[131072]{0}', space=vmem, size = 0x20000, scoped, tag = 'input window, operand 1']
    #allocation7 [shape = 's32[2]{0}', space=sflag, size = 0x8, scoped, tag = 'scoped memory for tpu_custom_call.1']
    %8 = vsyncpa [#allocation7], 0
    %s9 = scalar_lea.sflag [#allocation7], 1
    %10 = vsyncpa %s9, 0
    loop: start=0, step=1, limit=4
    $region2: #{tpu_custom_call.1} parent=1 // loop_pre_header
      _
    $region3: #{tpu_custom_call.1} parent=1 // loop_header
      %s12 = sphi 0, %s16
      %p13 = scmp.ge.s32.totalorder %s12, 4
      %s19 = sphi 0, %s31
      %s20 = sphi 0, %s27
      %s21 = sphi 0, %s19
      %s22 = sphi 0, %s20
      %s23 = sphi 0, %s21
      %s24 = sphi 0, %s22
      %s34 = sphi 0, %s36
      %s37 = sphi 0, %s34
      %s38 = sphi 0, %s37
      %s54 = sphi 0, %s38
      %s60 = sphi 0, %s62
      %s63 = sphi 0, %s60
      %s64 = sphi 0, %s63
      %s80 = sphi 0, %s64
      %s86 = sphi 0, %s88
      %s89 = sphi 0, %s86
      %s90 = sphi 0, %s89
      %s106 = sphi 0, %s90
      %s112 = sphi 0, %s114
      %s115 = sphi 0, %s112
      %s116 = sphi 0, %s115
      %s132 = sphi 0, %s116
    $region4: #{tpu_custom_call.1} parent=1 // loop_header_branch
      %15 = sbr.rel (%p13) target = $region8
    $region5: #{tpu_custom_call.1} parent=1 // loop_body
      %s17 = ssub.s32 %s12, 1
      %s18 = ssub.s32 %s12, 2
      %s25 = sadd.s32 1, %s20
      %p26 = scmp.ge.s32.totalorder %s25, 2
      %s27 = scalar_select %p26, 0, %s25
      %s28 = sadd.s32 1, %s19
      %s29 = scalar_select %p26, %s28, %s19
      %p30 = scmp.ge.s32.totalorder %s29, 1
      %s31 = scalar_select %p30, 0, %s29
      %s32 = ssub.s32 %s19, %s31
      %p33 = scmp.eq.s32.totalorder %s32, 0
      %s35 = sadd.s32 %s34, 1
      %s36 = scalar_select %p33, %s34, %s35
      %p39 = pneg %p33
      %p40 = scmp.eq.s32.totalorder %s12, 1
      %p41 = por %p39, %p40
      %p42 = scmp.ne.s32.totalorder %s34, %s37
      %p43 = scmp.eq.s32.totalorder %s12, 0
      %p44 = por %p42, %p43
      %p45 = scmp.ne.s32.totalorder %s34, %s37
      %p46 = scmp.eq.s32.totalorder %s17, 1
      %p47 = por %p45, %p46
      %p48 = scmp.ne.s32.totalorder %s37, %s38
      %p49 = scmp.eq.s32.totalorder %s17, 0
      %p50 = por %p48, %p49
      %p51 = scmp.ne.s32.totalorder %s37, %s38
      %p52 = scmp.eq.s32.totalorder %s18, 1
      %p53 = por %p51, %p52
      %p55 = scmp.ne.s32.totalorder %s38, %s54
      %p56 = scmp.eq.s32.totalorder %s18, 0
      %p57 = por %p55, %p56
      %s58 = ssub.s32 %s20, %s27
      %p59 = scmp.eq.s32.totalorder %s58, 0
      %s61 = sadd.s32 %s60, 1
      %s62 = scalar_select %p59, %s60, %s61
      %p65 = pneg %p59
      %p66 = scmp.eq.s32.totalorder %s12, 1
      %p67 = por %p65, %p66
      %p68 = scmp.ne.s32.totalorder %s60, %s63
      %p69 = scmp.eq.s32.totalorder %s12, 0
      %p70 = por %p68, %p69
      %p71 = scmp.ne.s32.totalorder %s60, %s63
      %p72 = scmp.eq.s32.totalorder %s17, 1
      %p73 = por %p71, %p72
      %p74 = scmp.ne.s32.totalorder %s63, %s64
      %p75 = scmp.eq.s32.totalorder %s17, 0
      %p76 = por %p74, %p75
      %p77 = scmp.ne.s32.totalorder %s63, %s64
      %p78 = scmp.eq.s32.totalorder %s18, 1
      %p79 = por %p77, %p78
      %p81 = scmp.ne.s32.totalorder %s64, %s80
      %p82 = scmp.eq.s32.totalorder %s18, 0
      %p83 = por %p81, %p82
      %s84 = ssub.s32 %s19, %s31
      %p85 = scmp.eq.s32.totalorder %s84, 0
      %s87 = sadd.s32 %s86, 1
      %s88 = scalar_select %p85, %s86, %s87
      %p91 = pneg %p85
      %p92 = scmp.eq.s32.totalorder %s12, 1
      %p93 = por %p91, %p92
      %p94 = scmp.ne.s32.totalorder %s86, %s89
      %p95 = scmp.eq.s32.totalorder %s12, 0
      %p96 = por %p94, %p95
      %p97 = scmp.ne.s32.totalorder %s86, %s89
      %p98 = scmp.eq.s32.totalorder %s17, 1
      %p99 = por %p97, %p98
      %p100 = scmp.ne.s32.totalorder %s89, %s90
      %p101 = scmp.eq.s32.totalorder %s17, 0
      %p102 = por %p100, %p101
      %p103 = scmp.ne.s32.totalorder %s89, %s90
      %p104 = scmp.eq.s32.totalorder %s18, 1
      %p105 = por %p103, %p104
      %p107 = scmp.ne.s32.totalorder %s90, %s106
      %p108 = scmp.eq.s32.totalorder %s18, 0
      %p109 = por %p107, %p108
      %s110 = ssub.s32 %s19, %s31
      %p111 = scmp.eq.s32.totalorder %s110, 0
      %s113 = sadd.s32 %s112, 1
      %s114 = scalar_select %p111, %s112, %s113
      %p117 = pneg %p111
      %p118 = scmp.eq.s32.totalorder %s12, 1
      %p119 = por %p117, %p118
      %p120 = scmp.ne.s32.totalorder %s112, %s115
      %p121 = scmp.eq.s32.totalorder %s12, 0
      %p122 = por %p120, %p121
      %p123 = scmp.ne.s32.totalorder %s112, %s115
      %p124 = scmp.eq.s32.totalorder %s17, 1
      %p125 = por %p123, %p124
      %p126 = scmp.ne.s32.totalorder %s115, %s116
      %p127 = scmp.eq.s32.totalorder %s17, 0
      %p128 = por %p126, %p127
      %p129 = scmp.ne.s32.totalorder %s115, %s116
      %p130 = scmp.eq.s32.totalorder %s18, 1
      %p131 = por %p129, %p130
      %p133 = scmp.ne.s32.totalorder %s116, %s132
      %p134 = scmp.eq.s32.totalorder %s18, 0
      %p135 = por %p133, %p134
      %p136 = scmp.le.s32.totalorder 1, %s12
      %p137 = scmp.lt.s32.totalorder %s12, 3
      %p138 = pnand %p136, %p137
      %p139 = pneg %p138
      // Predicated region
      $region9: #{tpu_custom_call.1} parent=5 // pred_check
        _
      $region10: #{tpu_custom_call.1} parent=5 // pred_check_branch
        %141 = sbr.rel (%p138) target = $region12
      $region11: #{tpu_custom_call.1} parent=5 // pred_region
        %s142 = ssub.s32 %s12, 1
        // Predicated region
        $region13: #{tpu_custom_call.1} parent=11 // pred_check
          %p143 = pneg %p50
        $region14: #{tpu_custom_call.1} parent=11 // pred_check_branch
          %145 = sbr.rel (%p143) target = $region16
        $region15: #{tpu_custom_call.1} parent=11 // pred_region
          %p146 = scmp.lt.s32.totalorder %s21, 0
          %s147 = scalar_select %p146, %s21, 0
          %s148 = smul.addr %s147, 8
          %s149 = scalar_lea.vmem %s0, %s148
        $region16: #{tpu_custom_call.1} parent=11 // pred_fallthru
          _
        // Predicated region
        $region17: #{tpu_custom_call.1} parent=11 // pred_check
          %p150 = pneg %p102
        $region18: #{tpu_custom_call.1} parent=11 // pred_check_branch
          %152 = sbr.rel (%p150) target = $region20
        $region19: #{tpu_custom_call.1} parent=11 // pred_region
          %p153 = scmp.lt.s32.totalorder %s21, 0
          %s154 = scalar_select %p153, %s21, 0
          %s155 = smul.addr %s154, 8
          %s156 = scalar_lea.vmem %s2, %s155
        $region20: #{tpu_custom_call.1} parent=11 // pred_fallthru
          _
      $region12: #{tpu_custom_call.1} parent=5 // pred_fallthru
        _
      %p157 = scmp.lt.s32.totalorder %s12, 2
      // Predicated region
      $region21: #{tpu_custom_call.1} parent=5 // pred_check
        %p158 = pneg %p157
      $region22: #{tpu_custom_call.1} parent=5 // pred_check_branch
        %160 = sbr.rel (%p158) target = $region24
      $region23: #{tpu_custom_call.1} parent=5 // pred_region
        // Predicated region
        $region25: #{tpu_custom_call.1} parent=23 // pred_check
          %p161 = pneg %p70
        $region26: #{tpu_custom_call.1} parent=23 // pred_check_branch
          %163 = sbr.rel (%p161) target = $region28
        $region27: #{tpu_custom_call.1} parent=23 // pred_region
          %s164 = sand.u32 %s60, 1
          %s165 = scalar_lea.sflag [#allocation7], %s164
          %s166 = sand.u32 %s60, 1
          %s167 = smul.addr %s166, 128
          %s168 = scalar_lea.vmem [#allocation6], %s167
          %s170 = ssub.s32 2048, 2048
          %171 = vsyncadd %s165, %s170
          %s172 = smul.addr %s20, 128
          %s173 = scalar_lea.hbm %s1, %s172
          %s174 = sshll.u32 %s168, 4
          %s175 = int_to_ptr.vmem [resolvable:$true] %s174
          %180 = dma.hbm_to_vmem [thread:$0]  %s173, 2048, %s175, %s165, 256, 128, 8
        $region28: #{tpu_custom_call.1} parent=23 // pred_fallthru
          _
      $region24: #{tpu_custom_call.1} parent=5 // pred_fallthru
        _
      %p181 = scmp.le.s32.totalorder 1, %s12
      %p182 = scmp.lt.s32.totalorder %s12, 3
      %p183 = pnand %p181, %p182
      %p184 = pneg %p183
      // Predicated region
      $region29: #{tpu_custom_call.1} parent=5 // pred_check
        _
      $region30: #{tpu_custom_call.1} parent=5 // pred_check_branch
        %186 = sbr.rel (%p183) target = $region32
      $region31: #{tpu_custom_call.1} parent=5 // pred_region
        %s187 = ssub.s32 %s12, 1
        %s188 = sand.u32 %s63, 1
        %s189 = scalar_lea.sflag [#allocation7], %s188
        %s190 = sand.u32 %s63, 1
        %s191 = smul.addr %s190, 128
        %s192 = scalar_lea.vmem [#allocation6], %s191
        // Predicated region
        $region33: #{tpu_custom_call.1} parent=31 // pred_check
          %p193 = pneg %p76
        $region34: #{tpu_custom_call.1} parent=31 // pred_check_branch
          %195 = sbr.rel (%p193) target = $region36
        $region35: #{tpu_custom_call.1} parent=31 // pred_region
          %196 = dma.done %s189, 2048
        $region36: #{tpu_custom_call.1} parent=31 // pred_fallthru
          _
        %p197 = scmp.lt.s32.totalorder %s21, 0
        %s198 = scalar_select %p197, %s21, 0
        %s199 = smul.addr %s198, 8
        %s200 = scalar_lea.vmem %s0, %s199
        %p201 = pneg %p50
        %p202 = pneg %p47
        %s203 = sand.u32 %s63, 1
        %s204 = scalar_lea.sflag [#allocation7], %s203
        %s205 = sand.u32 %s63, 1
        %s206 = smul.addr %s205, 128
        %s207 = scalar_lea.vmem [#allocation6], %s206
        %p208 = pneg %p76
        %p209 = pneg %p73
        %p210 = scmp.lt.s32.totalorder %s21, 0
        %s211 = scalar_select %p210, %s21, 0
        %s212 = smul.addr %s211, 8
        %s213 = scalar_lea.vmem %s2, %s212
        %p214 = pneg %p102
        %p215 = pneg %p99
        %p216 = pneg %p128
        %p217 = pneg %p125
        %p218 = scmp.lt.s32.totalorder %s21, 0
        %s219 = scalar_select %p218, %s21, 0
        %s220 = smul.addr %s219, 8
        %s221 = scalar_lea.vmem %s3, %s220
        %p222 = scmp.lt.s32.totalorder %s21, 0
        %s223 = scalar_select %p222, %s21, 0
        %s224 = smul.addr %s223, 8
        %s225 = scalar_lea.vmem %s0, %s224
        %p226 = scmp.lt.s32.totalorder %s21, 0
        %s227 = scalar_select %p226, %s21, 0
        %s228 = smul.addr %s227, 8
        %s229 = scalar_lea.vmem %s2, %s228
        %p230 = scmp.lt.s32.totalorder %s21, 0
        %s231 = scalar_select %p230, %s21, 0
        %s232 = smul.addr %s231, 8
        %s233 = scalar_lea.vmem %s3, %s232
        %p234 = scmp.eq.s32.totalorder %s22, 0
        // Predicated region
        $region37: #{tpu_custom_call.1} parent=31 // pred_check
          %p235 = pneg %p234
        $region38: #{tpu_custom_call.1} parent=31 // pred_check_branch
          %237 = sbr.rel (%p235) target = $region40
        $region39: #{tpu_custom_call.1} parent=31 // pred_region
          %v238 = vld [vmem:[%s225] sm:$0xff]
          %v239 = vmul.f32 %v238, %v238
          %240 = vadd.xlane.f32.xlu0 %v239
          %v241 = vpop.xlane.xlu0 %240
          %v242 = vadd.f32 %v241, 1e-24
          %v243 = vrsqrt.pop %v242
          %v244 = vmul.f32 %v243, 64.0
          %v245 = vmul.f32 %v238, %v244
          %246 = vst [vmem:[#allocation2] sm:$0xff] %v245
          %vm247 = vcmask 7168
          %248 = vst.msk [vmem:[#allocation3] sm:$0xff] %vm247, -1e+30
          %249 = vst.msk [vmem:[#allocation4] sm:$0xff] %vm247, 0.0
          %250 = vst.msk [vmem:[#allocation5] sm:$0xff] %vm247, 0.0
        $region40: #{tpu_custom_call.1} parent=31 // pred_fallthru
          _
        %v251 = vld [vmem:[#allocation2] sm:$0xff]
        %v252 = vld [vmem:[%s192] sm:$0xff]
        %v253 = vld [vmem:[%s192 + $0x8] sm:$0xff]
        %v254 = vld [vmem:[%s192 + $0x10] sm:$0xff]
        %v255 = vld [vmem:[%s192 + $0x18] sm:$0xff]
        %v256 = vld [vmem:[%s192 + $0x20] sm:$0xff]
        %v257 = vld [vmem:[%s192 + $0x28] sm:$0xff]
        %v258 = vld [vmem:[%s192 + $0x30] sm:$0xff]
        %v259 = vld [vmem:[%s192 + $0x38] sm:$0xff]
        %v260 = vld [vmem:[%s192 + $0x40] sm:$0xff]
        %v261 = vld [vmem:[%s192 + $0x48] sm:$0xff]
        %v262 = vld [vmem:[%s192 + $0x50] sm:$0xff]
        %v263 = vld [vmem:[%s192 + $0x58] sm:$0xff]
        %v264 = vld [vmem:[%s192 + $0x60] sm:$0xff]
        %v265 = vld [vmem:[%s192 + $0x68] sm:$0xff]
        %v266 = vld [vmem:[%s192 + $0x70] sm:$0xff]
        %v267 = vld [vmem:[%s192 + $0x78] sm:$0xff]
        %268 = vmatprep.subr.mxu0 0.0
        %269 = vmatpush1.msra.mxu0 %v252
        %270 = vmatprep.subr.mxu0 0.0
        %271 = vmatpush1.msra.mxu0 %v253
        %272 = vmatprep.subr.mxu0 0.0
        %273 = vmatpush1.msra.mxu0 %v254
        %274 = vmatprep.subr.mxu0 0.0
        %275 = vmatpush1.msra.mxu0 %v255
        %276 = vmatprep.subr.mxu0 0.0
        %277 = vmatpush1.msra.mxu0 %v256
        %278 = vmatprep.subr.mxu0 0.0
        %279 = vmatpush1.msra.mxu0 %v257
        %280 = vmatprep.subr.mxu0 0.0
        %281 = vmatpush1.msra.mxu0 %v258
        %282 = vmatprep.subr.mxu0 0.0
        %283 = vmatpush1.msra.mxu0 %v259
        %284 = vmatprep.subr.mxu0 0.0
        %285 = vmatpush1.msra.mxu0 %v260
        %286 = vmatprep.subr.mxu0 0.0
        %287 = vmatpush1.msra.mxu0 %v261
        %288 = vmatprep.subr.mxu0 0.0
        %289 = vmatpush1.msra.mxu0 %v262
        %290 = vmatprep.subr.mxu0 0.0
        %291 = vmatpush1.msra.mxu0 %v263
        %292 = vmatprep.subr.mxu0 0.0
        %293 = vmatpush1.msra.mxu0 %v264
        %294 = vmatprep.subr.mxu0 0.0
        %295 = vmatpush1.msra.mxu0 %v265
        %296 = vmatprep.subr.mxu0 0.0
        %297 = vmatpush1.msra.mxu0 %v266
        %298 = vmatprep.subr.mxu0 0.0
        %299 = vmatpush1.msra.mxu0 %v267
        %300 = vmatprep.subr.mxu0 0.0
        %301 = vmatpush1.msra.mxu0 0.0
        %302 = vmatprep.subr.mxu0 0.0
        %303 = vmatpush1.msra.mxu0 0.0
        %304 = vmatprep.subr.mxu0 0.0
        %305 = vmatpush1.msra.mxu0 0.0
        %306 = vmatprep.subr.mxu0 0.0
        %307 = vmatpush1.msra.mxu0 0.0
        %308 = vmatprep.subr.mxu0 0.0
        %309 = vmatpush1.msra.mxu0 0.0
        %310 = vmatprep.subr.mxu0 0.0
        %311 = vmatpush1.msra.mxu0 0.0
        %312 = vmatprep.subr.mxu0 0.0
        %313 = vmatpush1.msra.mxu0 0.0
        %314 = vmatprep.subr.mxu0 0.0
        %315 = vmatpush1.msra.mxu0 0.0
        %316 = vmatprep.subr.mxu0 0.0
        %317 = vmatpush1.msra.mxu0 0.0
        %318 = vmatprep.subr.mxu0 0.0
        %319 = vmatpush1.msra.mxu0 0.0
        %320 = vmatprep.subr.mxu0 0.0
        %321 = vmatpush1.msra.mxu0 0.0
        %322 = vmatprep.subr.mxu0 0.0
        %323 = vmatpush1.msra.mxu0 0.0
        %324 = vmatprep.subr.mxu0 0.0
        %325 = vmatpush1.msra.mxu0 0.0
        %326 = vmatprep.subr.mxu0 0.0
        %327 = vmatpush1.msra.mxu0 0.0
        %328 = vmatprep.subr.mxu0 0.0
        %329 = vmatpush1.msra.mxu0 0.0
        %330 = vmatprep.subr.mxu0 0.0
        %331 = vmatpush1.msra.mxu0 0.0
        %332 = vmatprep.mubr.f32.mxu0 0.0
        %333 = vmatmul.mubr.f32.gmra.mrb[0].mxu0 %v251
        %v334 = vpop.f32.mrb[0].mxu0
        %v335 = vadd.f32 0.0, %v334
        %v336 = vpop.f32.mrb[0].mxu0
        %337 = vdwg.mxu0
        %v338 = vlaneseq
        %v339 = vand.u32 %v338, 127
        %v340 = vld [vmem:[%s229] sm:$0xff]
        %s341 = smul.u32 %s22, 128
        %v342 = vstv %s341
        %v343 = vsub.s32 %v340, %v342
        %344 = vset.pattern.permute.xlu0 0
        %345 = vperm.xlu0 %344, %v343
        %v346 = vpop.permute.xlu0 %345
        %vm347 = vcmp.eq.s32.totalorder %v339, %v346
        %v348 = vld [vmem:[#allocation5] sm:$0xff]
        %v349 = vsel %vm347, %v335, 0.0
        %350 = vadd.xlane.f32.xlu0 %v349
        %v351 = vpop.xlane.xlu0 %350
        %v352 = vadd.f32 %v348, %v351
        %vm353 = vcmask 7168
        %354 = vst.msk [vmem:[#allocation5] sm:$0xff] %vm353, %v352
        %vm355 = vmxor %vm347, 1
        %v356 = vsel %vm355, %v335, -1e+30
        %v357 = vld [vmem:[#allocation3] sm:$0xff]
        %358 = vmax.xlane.f32.xlu0 %v356
        %v359 = vpop.xlane.xlu0 %358
        %v360 = vmax.f32 %v357, %v359
        %v361 = vld [vmem:[#allocation4] sm:$0xff]
        %v362 = vsub.f32 %v357, %v360
        %v363 = vmul.f32 %v362, 1.442695
        %v364 = vpow.pop %v363
        %v365 = vmul.f32 %v361, %v364
        %367 = vset.pattern.permute.xlu0 0
        %368 = vperm.xlu0 %367, %v360
        %v369 = vpop.permute.xlu0 %368
        %v371 = vsub.f32 %v356, %v369
        %v372 = vmul.f32 %v371, 1.442695
        %v373 = vpow.pop %v372
        %374 = vadd.xlane.f32.xlu0 %v373
        %v375 = vpop.xlane.xlu0 %374
        %v376 = vadd.f32 %v365, %v375
        %377 = vst.msk [vmem:[#allocation4] sm:$0xff] %vm353, %v376
        %378 = vst.msk [vmem:[#allocation3] sm:$0xff] %vm353, %v360
        %p379 = scmp.eq.s32.totalorder %s22, 1
        // Predicated region
        $region41: #{tpu_custom_call.1} parent=31 // pred_check
          %p380 = pneg %p379
        $region42: #{tpu_custom_call.1} parent=31 // pred_check_branch
          %382 = sbr.rel (%p380) target = $region44
        $region43: #{tpu_custom_call.1} parent=31 // pred_region
          %v383 = vld [vmem:[#allocation5] sm:$0xff]
          %v384 = vmul.f32 %v383, 0.015625
          %v385 = vmax.f32 %v384, -0.9999999
          %v386 = vmin.f32 %v385, 0.9999999
          %v387 = vmul.f32 %v386, 0.87758255
          %v388 = vmul.f32 %v386, %v386
          %v389 = vsub.f32 1.0, %v388
          %v390 = vrsqrt.pop %v389
          %v391 = vmul.f32 %v389, %v390
          %vm392 = vcmp.eq.f32.partialorder %v389, inf
          %v393 = vsel %vm392, %v389, %v391
          %vm394 = vcmp.eq.f32.partialorder %v389, 0.0
          %v395 = vand.u32 %v389, 2147483648
          %v396 = vsel %vm394, %v395, %v393
          %v397 = vmul.f32 %v396, 0.47942555
          %v398 = vsub.f32 %v387, %v397
          %v399 = vmul.f32 %v398, 64.0
          %v400 = vld [vmem:[#allocation3] sm:$0xff]
          %v401 = vmax.f32 %v400, %v399
          %v402 = vsub.f32 %v399, %v401
          %v403 = vmul.f32 %v402, 1.442695
          %v404 = vpow.pop %v403
          %v405 = vld [vmem:[#allocation4] sm:$0xff]
          %v406 = vsub.f32 %v400, %v401
          %v407 = vmul.f32 %v406, 1.442695
          %v408 = vpow.pop %v407
          %v409 = vmul.f32 %v405, %v408
          %v410 = vadd.f32 %v404, %v409
          %v411 = vlog2.pop %v410
          %v412 = vmul.f32 %v411, 0.6931472
          %v413 = vadd.f32 %v401, %v412
          %v414 = vsub.f32 %v399, %v413
          %415 = vst.msk [vmem:[%s233] sm:$0xff] %vm353, %v414
        $region44: #{tpu_custom_call.1} parent=31 // pred_fallthru
          _
        %p416 = scmp.lt.s32.totalorder %s21, 0
        %s417 = scalar_select %p416, %s21, 0
        %s418 = smul.addr %s417, 8
        %s419 = scalar_lea.vmem %s3, %s418
        // Predicated region
        $region45: #{tpu_custom_call.1} parent=31 // pred_check
          %p420 = pneg %p125
        $region46: #{tpu_custom_call.1} parent=31 // pred_check_branch
          %422 = sbr.rel (%p420) target = $region48
        $region47: #{tpu_custom_call.1} parent=31 // pred_region
          _
        $region48: #{tpu_custom_call.1} parent=31 // pred_fallthru
          _
        // Predicated region
        $region49: #{tpu_custom_call.1} parent=31 // pred_check
          %p423 = pneg %p125
        $region50: #{tpu_custom_call.1} parent=31 // pred_check_branch
          %425 = sbr.rel (%p423) target = $region52
        $region51: #{tpu_custom_call.1} parent=31 // pred_region
          %p426 = scmp.lt.s32.totalorder %s21, 0
          %s427 = scalar_select %p426, %s21, 0
          %s428 = smul.addr %s427, 8
          %s429 = scalar_lea.vmem %s3, %s428
        $region52: #{tpu_custom_call.1} parent=31 // pred_fallthru
          _
      $region32: #{tpu_custom_call.1} parent=5 // pred_fallthru
        _
      %p430 = scmp.le.s32.totalorder 2, %s12
      // Predicated region
      $region53: #{tpu_custom_call.1} parent=5 // pred_check
        %p431 = pneg %p430
      $region54: #{tpu_custom_call.1} parent=5 // pred_check_branch
        %433 = sbr.rel (%p431) target = $region56
      $region55: #{tpu_custom_call.1} parent=5 // pred_region
        %s434 = ssub.s32 %s12, 2
      $region56: #{tpu_custom_call.1} parent=5 // pred_fallthru
        _
    $region6: #{tpu_custom_call.1} parent=1 // loop_footer
      %s16 = sadd.s32 1, %s12
    $region7: #{tpu_custom_call.1} parent=1 // loop_footer_branch
      %11 = sbr.rel target = $region3
    $region8: #{tpu_custom_call.1} parent=1 // loop_exit
      _
    %435 = vsyncpa [#allocation7], 1
    %s436 = scalar_lea.sflag [#allocation7], 1
    %437 = vsyncpa %s436, 1

</llo_original>
